<compile_context>
chip_gen: v7x
topology: tpu7x:2x2x1
jax: 0.10.0
libtpu: 0.0.40
codegen_flags: <defaults>
</compile_context>

<pallas_src>
import functools

import jax
import jax.numpy as jnp
from jax import lax
from jax.experimental import pallas as pl
from jax.experimental.pallas import tpu as pltpu

EPS = 1e-5
_VMEM_LIMIT = 32 * 1024 * 1024  # safe scoped-VMEM budget on v5e / v6e / v7x


def _stats_kernel(x_ref, sum_ref, sumsq_ref, *, n, l, tn, tl):
    # x_ref:               (TN, TC, TL) tile of the (N, C, L) input.
    # sum_ref, sumsq_ref:  (1, TC, 1) f32 per-channel accumulators,
    #                      output-resident across the trailing (N, L) grid axes.
    ni = pl.program_id(1)
    li = pl.program_id(2)

    @pl.when(jnp.logical_and(ni == 0, li == 0))
    def _():
        sum_ref[...] = jnp.zeros_like(sum_ref)
        sumsq_ref[...] = jnp.zeros_like(sumsq_ref)

    x = x_ref[...].astype(jnp.float32)
    # Mask out-of-bounds batch rows (ragged N tile) and lanes (ragged L tile)
    # so garbage reads past the array boundary never enter the reduction.
    n_idx = lax.broadcasted_iota(jnp.int32, x.shape, 0) + ni * tn
    l_idx = lax.broadcasted_iota(jnp.int32, x.shape, 2) + li * tl
    x = jnp.where(jnp.logical_and(n_idx < n, l_idx < l), x, 0.0)

    # Single fused pass: sum and sum-of-squares (f32 accumulation).
    sum_ref[...] += jnp.sum(x, axis=(0, 2), keepdims=True)
    sumsq_ref[...] += jnp.sum(x * x, axis=(0, 2), keepdims=True)


def _normalize_kernel(x_ref, scale_ref, shift_ref, o_ref):
    # x_ref / o_ref: (TN, TC, TL);  scale_ref / shift_ref: (1, TC, 1) f32.
    x = x_ref[...].astype(jnp.float32)
    y = x * scale_ref[...] + shift_ref[...]
    o_ref[...] = y.astype(o_ref.dtype)


def batch_norm_1d(x, gamma, beta, eps=EPS):
    """Training-mode BatchNorm1d forward. x: (N, C, L); gamma, beta: (C,)."""
    n, c, l = x.shape

    # Tile sizes: lane-dense L tiles (up to 1024 lanes), sublane C tiles (up to
    # 128), and an N tile chosen so one f32 working block stays <= ~2 MiB.
    tl = 128 * min(pl.cdiv(l, 128), 8)
    tc = 8 * min(pl.cdiv(c, 8), 16)
    tn = max(1, min(n, (2 * 1024 * 1024 // 4) // (tc * tl)))

    num_c = pl.cdiv(c, tc)
    num_n = pl.cdiv(n, tn)
    num_l = pl.cdiv(l, tl)
    c_pad = num_c * tc

    x_spec = pl.BlockSpec((tn, tc, tl), lambda ci, ni, li: (ni, ci, li))
    ch_spec = pl.BlockSpec((1, tc, 1), lambda ci, ni, li: (ci, 0, 0))

    # ---- Pass 1: per-channel sum / sum-of-squares ---------------------------
    sums, sumsqs = pl.pallas_call(
        functools.partial(_stats_kernel, n=n, l=l, tn=tn, tl=tl),
        out_shape=(
            jax.ShapeDtypeStruct((num_c, tc, 1), jnp.float32),
            jax.ShapeDtypeStruct((num_c, tc, 1), jnp.float32),
        ),
        grid=(num_c, num_n, num_l),
        in_specs=[x_spec],
        out_specs=(ch_spec, ch_spec),
        compiler_params=pltpu.CompilerParams(
            dimension_semantics=("parallel", "arbitrary", "arbitrary"),
            vmem_limit_bytes=_VMEM_LIMIT),
    )(x)

    # ---- Tiny per-channel math (size C, plain JAX) ---------------------------
    count = float(n * l)
    s = sums.reshape(c_pad)[:c]
    s2 = sumsqs.reshape(c_pad)[:c]
    mean = s / count
    var = jnp.maximum(s2 / count - mean * mean, 0.0)  # biased variance
    scale = gamma.astype(jnp.float32) * lax.rsqrt(var + eps)
    shift = beta.astype(jnp.float32) - mean * scale
    scale_p = jnp.zeros((c_pad,), jnp.float32).at[:c].set(scale).reshape(num_c, tc, 1)
    shift_p = jnp.zeros((c_pad,), jnp.float32).at[:c].set(shift).reshape(num_c, tc, 1)

    # ---- Pass 2: y = x * scale + shift ---------------------------------------
    out = pl.pallas_call(
        _normalize_kernel,
        out_shape=jax.ShapeDtypeStruct((n, c, l), x.dtype),
        grid=(num_c, num_n, num_l),
        in_specs=[x_spec, ch_spec, ch_spec],
        out_specs=x_spec,
        compiler_params=pltpu.CompilerParams(
            dimension_semantics=("parallel", "parallel", "arbitrary"),
            vmem_limit_bytes=_VMEM_LIMIT),
    )(x, scale_p, shift_p)
    return out


def _reference_bn(x, gamma, beta, eps=EPS):
    # Pure-JAX reference of PyTorch BatchNorm1d training-mode forward.
    mean = jnp.mean(x, axis=(0, 2), keepdims=True)
    var = jnp.mean((x - mean) ** 2, axis=(0, 2), keepdims=True)
    return ((x - mean) * lax.rsqrt(var + eps) * gamma.reshape(1, -1, 1)
            + beta.reshape(1, -1, 1))


if __name__ == "__main__":
    key = jax.random.PRNGKey(0)
    N, C, L = 2, 4, 16  # BatchNorm1d(nm=4), input NCL

    kx, kg, kb = jax.random.split(key, 3)
    x = jax.random.normal(kx, (N, C, L), dtype=jnp.float32)
    # nn.BatchNorm1d default init is weight=1 / bias=0; use non-trivial values
    # to exercise the affine path of the kernel as well.
    gamma = 1.0 + 0.1 * jax.random.normal(kg, (C,), dtype=jnp.float32)
    beta = 0.1 * jax.random.normal(kb, (C,), dtype=jnp.float32)

    out = jax.block_until_ready(batch_norm_1d(x, gamma, beta))
    ref = _reference_bn(x, gamma, beta)

    assert out.shape == (N, C, L)
    assert jnp.allclose(out, ref, atol=1e-5, rtol=1e-5), "mismatch vs reference"

    print("KERNEL_OK")
</pallas_src>

<mosaic_0001>
module attributes {stable_mosaic.version = 11 : i64} {
  func.func @_stats_kernel(%arg0: i32, %arg1: i32, %arg2: i32, %arg3: memref<2x8x128xf32, #tpu.memory_space<vmem>>, %arg4: memref<1x8x1xf32, #tpu.memory_space<vmem>>, %arg5: memref<1x8x1xf32, #tpu.memory_space<vmem>>) attributes {dimension_semantics = [#tpu.dimension_semantics<parallel>, #tpu.dimension_semantics<arbitrary>, #tpu.dimension_semantics<arbitrary>], iteration_bounds = array<i64: 1, 1, 1>, scalar_prefetch = 0 : i64, scratch_operands = 0 : i64, tpu.core_type = #tpu.core_type<tc>, window_params = [{transform_indices = @transform_0, window_bounds = array<i64: 2, 8, 128>}, {transform_indices = @transform_1, window_bounds = array<i64: 1, 8, 1>}, {transform_indices = @transform_2, window_bounds = array<i64: 1, 8, 1>}]} {
    %c0_i32 = arith.constant 0 : i32
    %0 = arith.cmpi eq, %arg1, %c0_i32 : i32
    %c0_i32_0 = arith.constant 0 : i32
    %1 = arith.cmpi eq, %arg2, %c0_i32_0 : i32
    %2 = arith.andi %0, %1 : i1
    %3 = arith.extui %2 : i1 to i32
    %c0_i32_1 = arith.constant 0 : i32
    %4 = arith.cmpi ne, %3, %c0_i32_1 : i32
    scf.if %4 {
      %cst_19 = arith.constant 0.000000e+00 : f32
      %32 = vector.broadcast %cst_19 : f32 to vector<1x8x1xf32>
      %c0_20 = arith.constant 0 : index
      %c0_21 = arith.constant 0 : index
      %c0_22 = arith.constant 0 : index
      %33 = vector.load %arg4[%c0_20, %c0_21, %c0_22] : memref<1x8x1xf32, #tpu.memory_space<vmem>>, vector<1x8x1xf32>
      tpu.vector_store %arg4[%c0_20, %c0_21, %c0_22], %32 {strides = array<i32>} : memref<1x8x1xf32, #tpu.memory_space<vmem>>, vector<1x8x1xf32>,
      %cst_23 = arith.constant 0.000000e+00 : f32
      %34 = vector.broadcast %cst_23 : f32 to vector<1x8x1xf32>
      %c0_24 = arith.constant 0 : index
      %c0_25 = arith.constant 0 : index
      %c0_26 = arith.constant 0 : index
      %35 = vector.load %arg5[%c0_24, %c0_25, %c0_26] : memref<1x8x1xf32, #tpu.memory_space<vmem>>, vector<1x8x1xf32>
      tpu.vector_store %arg5[%c0_24, %c0_25, %c0_26], %34 {strides = array<i32>} : memref<1x8x1xf32, #tpu.memory_space<vmem>>, vector<1x8x1xf32>,
    } else {
    }
    %c0 = arith.constant 0 : index
    %c0_2 = arith.constant 0 : index
    %c0_3 = arith.constant 0 : index
    %5 = vector.load %arg3[%c0, %c0_2, %c0_3] : memref<2x8x128xf32, #tpu.memory_space<vmem>>, vector<2x8x128xf32>
    %6 = tpu.iota {dimensions = array<i32: 0>} : vector<2x8x128xi32>
    %c2_i32 = arith.constant 2 : i32
    %7 = arith.muli %arg1, %c2_i32 : i32
    %8 = vector.broadcast %7 : i32 to vector<2x8x128xi32>
    %9 = arith.addi %6, %8 : vector<2x8x128xi32>
    %10 = tpu.iota {dimensions = array<i32: 2>} : vector<2x8x128xi32>
    %c128_i32 = arith.constant 128 : i32
    %11 = arith.muli %arg2, %c128_i32 : i32
    %12 = vector.broadcast %11 : i32 to vector<2x8x128xi32>
    %13 = arith.addi %10, %12 : vector<2x8x128xi32>
    %c2_i32_4 = arith.constant 2 : i32
    %14 = vector.broadcast %c2_i32_4 : i32 to vector<2x8x128xi32>
    %15 = arith.cmpi slt, %9, %14 : vector<2x8x128xi32>
    %c16_i32 = arith.constant 16 : i32
    %16 = vector.broadcast %c16_i32 : i32 to vector<2x8x128xi32>
    %17 = arith.cmpi slt, %13, %16 : vector<2x8x128xi32>
    %18 = arith.andi %15, %17 : vector<2x8x128xi1>
    %cst = arith.constant 0.000000e+00 : f32
    %19 = vector.broadcast %cst : f32 to vector<2x8x128xf32>
    %20 = arith.select %18, %5, %19 : vector<2x8x128xi1>, vector<2x8x128xf32>
    %c0_5 = arith.constant 0 : index
    %c0_6 = arith.constant 0 : index
    %c0_7 = arith.constant 0 : index
    %21 = vector.load %arg4[%c0_5, %c0_6, %c0_7] : memref<1x8x1xf32, #tpu.memory_space<vmem>>, vector<1x8x1xf32>
    %cst_8 = arith.constant dense<0.000000e+00> : vector<8xf32>
    %22 = vector.multi_reduction <add>, %20, %cst_8 [0, 2] : vector<2x8x128xf32> to vector<8xf32>
    %23 = vector.shape_cast %22 : vector<8xf32> to vector<1x8x1xf32>
    %24 = arith.addf %21, %23 : vector<1x8x1xf32>
    %c0_9 = arith.constant 0 : index
    %c0_10 = arith.constant 0 : index
    %c0_11 = arith.constant 0 : index
    %25 = vector.load %arg4[%c0_9, %c0_10, %c0_11] : memref<1x8x1xf32, #tpu.memory_space<vmem>>, vector<1x8x1xf32>
    tpu.vector_store %arg4[%c0_9, %c0_10, %c0_11], %24 {strides = array<i32>} : memref<1x8x1xf32, #tpu.memory_space<vmem>>, vector<1x8x1xf32>,
    %c0_12 = arith.constant 0 : index
    %c0_13 = arith.constant 0 : index
    %c0_14 = arith.constant 0 : index
    %26 = vector.load %arg5[%c0_12, %c0_13, %c0_14] : memref<1x8x1xf32, #tpu.memory_space<vmem>>, vector<1x8x1xf32>
    %27 = arith.mulf %20, %20 : vector<2x8x128xf32>
    %cst_15 = arith.constant dense<0.000000e+00> : vector<8xf32>
    %28 = vector.multi_reduction <add>, %27, %cst_15 [0, 2] : vector<2x8x128xf32> to vector<8xf32>
    %29 = vector.shape_cast %28 : vector<8xf32> to vector<1x8x1xf32>
    %30 = arith.addf %26, %29 : vector<1x8x1xf32>
    %c0_16 = arith.constant 0 : index
    %c0_17 = arith.constant 0 : index
    %c0_18 = arith.constant 0 : index
    %31 = vector.load %arg5[%c0_16, %c0_17, %c0_18] : memref<1x8x1xf32, #tpu.memory_space<vmem>>, vector<1x8x1xf32>
    tpu.vector_store %arg5[%c0_16, %c0_17, %c0_18], %30 {strides = array<i32>} : memref<1x8x1xf32, #tpu.memory_space<vmem>>, vector<1x8x1xf32>,
    return
  }
  func.func @transform_0(%arg0: i32, %arg1: i32, %arg2: i32) -> (i32, i32, i32) {
    %c0_i32 = arith.constant 0 : i32
    return %arg1, %arg0, %arg2 : i32, i32, i32
  }
  func.func @transform_1(%arg0: i32, %arg1: i32, %arg2: i32) -> (i32, i32, i32) {
    %c0_i32 = arith.constant 0 : i32
    %c0_i32_0 = arith.constant 0 : i32
    %c0_i32_1 = arith.constant 0 : i32
    return %arg0, %c0_i32, %c0_i32_0 : i32, i32, i32
  }
  func.func @transform_2(%arg0: i32, %arg1: i32, %arg2: i32) -> (i32, i32, i32) {
    %c0_i32 = arith.constant 0 : i32
    %c0_i32_0 = arith.constant 0 : i32
    %c0_i32_1 = arith.constant 0 : i32
    return %arg0, %c0_i32, %c0_i32_0 : i32, i32, i32
  }
}

</mosaic_0001>

<llo_original>
// kernel: tpu_custom_call.1
$region0: #{tpu_custom_call.1}
  #allocation0 [shape = 'u32[]', space=smem, size = 0x4, offset = 0x4, fixed_abs, tag = 'smem constant byte address 0x4 - core index']
  #allocation1 [shape = 'u32[144,128]{1,0:T(1,128)}', space=vmem, size = 0x12000, scoped, tag = 'internal scratch']
  #allocation4 [shape = 's32[]', space=sflag, size = 0x4, offset = 0, fixed_abs, tag = 'sflag constant byte address 0x0 - dummy sync flag']
  %s0 = inlined_call_operand.hbm [shape: f32[2,4,16], index: 0, kind: input, shape index: {}]
  %s1 = inlined_call_operand.vmem [shape: f32[1,8,1], index: 1, kind: output, shape index: {0}]
  %s2 = inlined_call_operand.vmem [shape: f32[1,8,1], index: 2, kind: output, shape index: {1}]
  %3 = xla_tuple %s1, %s2
  %s4 = sld [smem:[#allocation0]]
  $region30: #{tpu_custom_call.1} parent=0
    _
  %s6 = ssub.s32 1, %s4
  %s7 = scalar_select 0, %s6, %s4
  $region1: #{tpu_custom_call.1} parent=0
    #allocation2 [shape = 'u8[8192]{0}', space=vmem, size = 0x2000, scoped, tag = 'input window, operand 0, single buffered']
    #allocation3 [shape = 's32[1]{0}', space=sflag, size = 0x4, scoped, tag = 'scoped memory for tpu_custom_call.1']
    %8 = vsyncpa [#allocation3], 0
    // Predicated region
    $region2: #{tpu_custom_call.1} parent=1 // pred_check
      _
    $region3: #{tpu_custom_call.1} parent=1 // pred_check_branch
      %10 = sbr.rel (0) target = $region5
    $region4: #{tpu_custom_call.1} parent=1 // pred_region
      #allocation5 [shape = 'u32[6]{0}', space=smem, size = 0x18, scoped, tag = 'DMA stride descriptor']
      %s12 = ssub.s32 256, 128
      %13 = vsyncadd [#allocation3], %s12
      %s15 = sshll.u32 1, 14
      %s16 = sxor.u32 4294967295, %s15
      %s18 = sld [smem:[#allocation0]]
      %s19 = sadd.s32 2, %s18
      %s21 = sshll.u32 7, 26
      %s22 = sxor.u32 4294967295, %s21
      %s23 = sand.u32 0, %s22
      %s24 = sshll.u32 %s19, 26
      %s25 = sor.u32 %s23, %s24
      %s26 = sshll.u32 [#allocation2], 4
      %s27 = int_to_ptr.vmem [resolvable:$true] %s26
      %33 = sst [smem:[#allocation5]] 64
      %s34 = scalar_lea.smem [#allocation5], 1
      %35 = sst [smem:[%s34]] 128
      %s36 = scalar_lea.smem [#allocation5], 2
      %37 = sst [smem:[%s36]] 1
      %s38 = scalar_lea.smem [#allocation5], 3
      %39 = sst [smem:[%s38]] 64
      %s40 = scalar_lea.smem [#allocation5], 4
      %41 = sst [smem:[%s40]] 64
      %s42 = scalar_lea.smem [#allocation5], 5
      %43 = sst [smem:[%s42]] 4
      %45 = dma.general %s0, 128, %s27, [#allocation3], [#allocation4], [#allocation5], %s25, 0
    $region5: #{tpu_custom_call.1} parent=1 // pred_fallthru
      _
    // Predicated region
    $region6: #{tpu_custom_call.1} parent=1 // pred_check
      _
    $region7: #{tpu_custom_call.1} parent=1 // pred_check_branch
      %47 = sbr.rel (0) target = $region9
    $region8: #{tpu_custom_call.1} parent=1 // pred_region
      %48 = dma.done [#allocation3], 256
    $region9: #{tpu_custom_call.1} parent=1 // pred_fallthru
      _
    %p49 = scmp.eq.s32.totalorder 0, 0
    %p50 = scmp.eq.s32.totalorder 0, 0
    %p51 = pnand %p49, %p50
    %p52 = pneg %p51
    // Predicated region
    $region10: #{tpu_custom_call.1} parent=1 // pred_check
      _
    $region11: #{tpu_custom_call.1} parent=1 // pred_check_branch
      %54 = sbr.rel (%p51) target = $region13
    $region12: #{tpu_custom_call.1} parent=1 // pred_region
      %vm55 = vcmask 7168
      %56 = vst.msk [vmem:[%s1] sm:$0xff] %vm55, 0.0
      %57 = vst.msk [vmem:[%s2] sm:$0xff] %vm55, 0.0
    $region13: #{tpu_custom_call.1} parent=1 // pred_fallthru
      _
    %v58 = vld [vmem:[#allocation2] sm:$0xff]
    %v59 = vld [vmem:[#allocation2 + $0x8] sm:$0xff]
    %s60 = smul.u32 0, 2
    %v61 = vstv %s60
    %v62 = vadd.s32 %v61, 1
    %v63 = vlaneseq
    %v64 = vand.u32 %v63, 127
    %s65 = smul.u32 0, 128
    %v66 = vstv %s65
    %v67 = vadd.s32 %v64, %v66
    %vm68 = vcmp.lt.s32.totalorder %v61, 2
    %vm69 = vcmp.lt.s32.totalorder %v62, 2
    %vm70 = vcmp.lt.s32.totalorder %v67, 16
    %vm71 = vmand %vm68, %vm70
    %vm72 = vmand %vm69, %vm70
    %v73 = vsel %vm71, %v58, 0.0
    %v74 = vsel %vm72, %v59, 0.0
    %v75 = vld [vmem:[%s1] sm:$0xff]
    %v76 = vadd.f32 %v73, %v74
    %77 = vadd.xlane.f32.xlu0 %v76
    %v78 = vpop.xlane.xlu0 %77
    %v79 = vadd.f32 %v75, %v78
    %vm80 = vcmask 7168
    %81 = vst.msk [vmem:[%s1] sm:$0xff] %vm80, %v79
    %v82 = vld [vmem:[%s2] sm:$0xff]
    %v83 = vmul.f32 %v73, %v73
    %v84 = vmul.f32 %v74, %v74
    %v85 = vadd.f32 %v83, %v84
    %86 = vadd.xlane.f32.xlu0 %v85
    %v87 = vpop.xlane.xlu0 %86
    %v88 = vadd.f32 %v82, %v87
    %89 = vst.msk [vmem:[%s2] sm:$0xff] %vm80, %v88
    // Predicated region
    $region14: #{tpu_custom_call.1} parent=1 // pred_check
      _
    $region15: #{tpu_custom_call.1} parent=1 // pred_check_branch
      %91 = sbr.rel (0) target = $region17
    $region16: #{tpu_custom_call.1} parent=1 // pred_region
      _
    $region17: #{tpu_custom_call.1} parent=1 // pred_fallthru
      _
    // Predicated region
    $region18: #{tpu_custom_call.1} parent=1 // pred_check
      _
    $region19: #{tpu_custom_call.1} parent=1 // pred_check_branch
      %93 = sbr.rel (0) target = $region21
    $region20: #{tpu_custom_call.1} parent=1 // pred_region
      _
    $region21: #{tpu_custom_call.1} parent=1 // pred_fallthru
      _
    // Predicated region
    $region22: #{tpu_custom_call.1} parent=1 // pred_check
      _
    $region23: #{tpu_custom_call.1} parent=1 // pred_check_branch
      %95 = sbr.rel (0) target = $region25
    $region24: #{tpu_custom_call.1} parent=1 // pred_region
      _
    $region25: #{tpu_custom_call.1} parent=1 // pred_fallthru
      _
    // Predicated region
    $region26: #{tpu_custom_call.1} parent=1 // pred_check
      _
    $region27: #{tpu_custom_call.1} parent=1 // pred_check_branch
      %97 = sbr.rel (0) target = $region29
    $region28: #{tpu_custom_call.1} parent=1 // pred_region
      _
    $region29: #{tpu_custom_call.1} parent=1 // pred_fallthru
      _
    %98 = vsyncpa [#allocation3], 1

</llo_original>
